<compile_context>
chip_gen: v7x
topology: tpu7x:2x2x1
jax: 0.10.0
libtpu: 0.0.40
codegen_flags: <defaults>
</compile_context>

<pallas_src>
import numpy as np
import jax
import jax.numpy as jnp
from jax import lax
from jax.experimental import pallas as pl
from jax.experimental.pallas import tpu as pltpu

_F32 = jnp.float32


# ---------------------------------------------------------------------------
# single-buffering probe for constant-index weight blocks
# ---------------------------------------------------------------------------
_SINGLE_BUF = "unprobed"


def _single_buffer_mode():
    """Return pl.Buffered(1) if this JAX/Mosaic build honors it, else None."""
    global _SINGLE_BUF
    if _SINGLE_BUF != "unprobed":
        return _SINGLE_BUF
    mode = None
    try:
        pm = pl.Buffered(1)

        def _probe(a_ref, w_ref, o_ref):
            o_ref[...] = a_ref[...] + w_ref[...]

        a = jnp.arange(16 * 128, dtype=_F32).reshape(16, 128)
        w = jnp.ones((8, 128), _F32)
        out = pl.pallas_call(
            _probe,
            out_shape=jax.ShapeDtypeStruct((16, 128), _F32),
            grid=(2,),
            in_specs=[pl.BlockSpec((8, 128), lambda i: (i, 0)),
                      pl.BlockSpec((8, 128), lambda i: (0, 0),
                                   pipeline_mode=pm)],
            out_specs=pl.BlockSpec((8, 128), lambda i: (i, 0)),
        )(a, w)
        if bool(jnp.allclose(jax.block_until_ready(out), a + 1.0)):
            mode = pm
    except Exception:
        mode = None
    _SINGLE_BUF = mode
    return mode


def _const_spec(shape, grid_rank):
    """BlockSpec for an operand whose block index never changes over the grid."""
    zeros = (0,) * len(shape)
    if grid_rank == 1:
        index_map = lambda i: zeros
    else:
        index_map = lambda b, j: zeros
    pm = _single_buffer_mode()
    if pm is not None:
        return pl.BlockSpec(shape, index_map, pipeline_mode=pm)
    return pl.BlockSpec(shape, index_map)


# ---------------------------------------------------------------------------
# Chan-style merge of per-block centered BN partials -> folded scale / shift
# ---------------------------------------------------------------------------
def _bn_fold(sums, m2s, counts, n_total, eps, gamma, beta):
    cb = sums.shape[-1]
    sums = sums.reshape(-1, cb)
    m2s = m2s.reshape(-1, cb)
    counts = counts.reshape(-1, 1).astype(_F32)
    mean_b = sums / counts
    mean = jnp.sum(sums, axis=0, keepdims=True) / n_total            # (1, Cb)
    m2 = jnp.sum(m2s + counts * (mean_b - mean) ** 2, axis=0, keepdims=True)
    var = jnp.maximum(m2 / n_total, 0.0)
    scale = gamma.reshape(1, cb) / jnp.sqrt(var + eps)
    shift = beta.reshape(1, cb) - mean * scale
    return scale, shift


# ---------------------------------------------------------------------------
# Wrapper
# ---------------------------------------------------------------------------
def shuffle_td_layer(x, w1, wd, w2, *,
                     gamma1=None, beta1=None, gamma2=None, beta2=None,
                     gamma3=None, beta3=None, eps=1e-5,
                     row_tile=512, seq_tile=512):
    """ShuffleTDLayer forward (stride=1), training-mode BatchNorm.

    x : (B, L, C) float32, C == input_dim == output_dim (stride-1 requirement)
    w1: (Cb, Cb)      branch2[0] Conv1d(Cb, Cb, 1) weight        (Cb = C // 2)
    wd: (Cb, 2, 3)    branch2[3] grouped Conv1d weight (groups = Cb // 2)
    w2: (Cb, Cb)      branch2[5] Conv1d(Cb, Cb, 1) weight
    (row_tile ~1024 is a better target on 128 MiB-VMEM parts (v5e/v6e); 512 is
     the safe default for v7x's 64 MiB.)
    """
    B, L, C = x.shape
    Cb = C // 2
    assert C == 2 * Cb and Cb % 2 == 0, "input_dim must be even (2*branch_features)"
    assert wd.shape == (Cb, 2, 3), "only context_size=3 (length-preserving) supported"

    def _aff(p, default):
        return default if p is None else p.astype(_F32)
    g1 = _aff(gamma1, jnp.ones((Cb,), _F32)); b1 = _aff(beta1, jnp.zeros((Cb,), _F32))
    g2 = _aff(gamma2, jnp.ones((Cb,), _F32)); b2 = _aff(beta2, jnp.zeros((Cb,), _F32))
    g3 = _aff(gamma3, jnp.ones((Cb,), _F32)); b3 = _aff(beta3, jnp.zeros((Cb,), _F32))

    x = x.astype(_F32)
    x_rows = x.reshape(B * L, C)            # free reshape; no half-channel copies
    R = B * L
    n_total = float(R)
    half_ok = (Cb % 128 == 0)               # lane-block half selection is legal

    # --- row tiling (kernels A, C, D): cdiv grid, masked tail block ---------
    TR = R if R <= row_tile else max(row_tile - row_tile % 8, 8)
    nb = pl.cdiv(R, TR)
    row_counts = jnp.asarray(np.minimum(TR, R - np.arange(nb) * TR), _F32)

    # --- sequence tiling (kernel B): cdiv grid, masked tail tile ------------
    TL = L if L <= seq_tile else max(seq_tile - seq_tile % 8, 8)
    nL = pl.cdiv(L, TL)
    seq_counts = jnp.asarray(np.tile(np.minimum(TL, L - np.arange(nL) * TL), B), _F32)

    # +-1 halo rows of x2 for every sequence tile (tiny: 2 rows per tile).
    idx_lo = np.maximum(np.arange(nL) * TL - 1, 0).astype(np.int32)
    idx_hi = np.minimum(np.arange(nL) * TL + TL, L - 1).astype(np.int32)
    halo = jnp.stack([x[:, idx_lo, Cb:], x[:, idx_hi, Cb:]], axis=2)   # (B,nL,2,Cb)

    # x-half selection specs (no wrapper-side slice copies of x).
    if half_ok:
        xr_x2_spec = pl.BlockSpec((TR, Cb), lambda i: (i, 1))
        xr_x1_spec = pl.BlockSpec((TR, Cb), lambda i: (i, 0))
        xs_x2_spec = pl.BlockSpec((1, TL, Cb), lambda b, j: (b, j, 1))
    else:
        xr_x2_spec = pl.BlockSpec((TR, C), lambda i: (i, 0))
        xr_x1_spec = pl.BlockSpec((TR, C), lambda i: (i, 0))
        xs_x2_spec = pl.BlockSpec((1, TL, C), lambda b, j: (b, j, 0))

    w1t = w1.astype(_F32).T                 # (Cb_in, Cb_out)

    # ---- Kernel A: per-block centered stats of y1 = conv1(x2) --------------
    def pw1_stats_kernel(x_ref, w1t_ref, sum_ref, m2_ref):
        i = pl.program_id(0)
        xb = x_ref[...]
        x2 = xb if half_ok else xb[:, Cb:]
        y = jnp.dot(x2, w1t_ref[...], preferred_element_type=_F32)
        nvalid = jnp.minimum(TR, R - i * TR)
        rows = lax.broadcasted_iota(jnp.int32, (TR, 1), 0)
        mask = rows < nvalid
        ones = jnp.ones((1, TR), _F32)
        s = jnp.dot(ones, jnp.where(mask, y, 0.0), preferred_element_type=_F32)
        yc = jnp.where(mask, y - s / nvalid.astype(_F32), 0.0)
        sum_ref[0] = s
        m2_ref[0] = jnp.dot(ones, yc * yc, preferred_element_type=_F32)

    sum1, m21 = pl.pallas_call(
        pw1_stats_kernel,
        out_shape=(jax.ShapeDtypeStruct((nb, 1, Cb), _F32),
                   jax.ShapeDtypeStruct((nb, 1, Cb), _F32)),
        grid=(nb,),
        in_specs=[xr_x2_spec, _const_spec((Cb, Cb), 1)],
        out_specs=(pl.BlockSpec((1, 1, Cb), lambda i: (i, 0, 0)),
                   pl.BlockSpec((1, 1, Cb), lambda i: (i, 0, 0))),
        compiler_params=pltpu.CompilerParams(dimension_semantics=("parallel",)),
    )(x_rows, w1t)

    s1, t1 = _bn_fold(sum1, m21, row_counts, n_total, eps, g1, b1)
    w1e = w1t * s1                          # BN1 folded into conv1 output cols

    # grouped k=3 conv -> one lane-concatenated (Cb, 3Cb) tap matrix (MXU)
    wd_f = wd.astype(_F32)
    i_idx = jnp.arange(Cb)[:, None]         # input channel
    o_idx = jnp.arange(Cb)[None, :]         # output channel
    rel = i_idx - 2 * (o_idx // 2)
    valid = (rel >= 0) & (rel < 2)
    rel_c = jnp.clip(rel, 0, 1)
    wtap = jnp.concatenate(
        [jnp.where(valid, wd_f[o_idx, rel_c, k], 0.0) for k in range(3)],
        axis=1)                             # (Cb, 3Cb): taps t-1 | t | t+1

    # ---- Kernel B: h = ReLU(BN1(conv1(x2))); z = grouped k=3 conv ----------
    def branch_mid_kernel(x_ref, halo_ref, w1e_ref, t1_ref, wtap_ref,
                          z_ref, sum_ref, m2_ref):
        j = pl.program_id(1)
        xb = x_ref[0]
        x2 = xb if half_ok else xb[:, Cb:]
        h = jnp.maximum(
            jnp.dot(x2, w1e_ref[...], preferred_element_type=_F32) + t1_ref[...],
            0.0)                                                      # (TL, Cb)
        a = jnp.dot(h, wtap_ref[...], preferred_element_type=_F32)    # (TL, 3Cb)
        h_halo = jnp.maximum(
            jnp.dot(halo_ref[0, 0], w1e_ref[...],
                    preferred_element_type=_F32) + t1_ref[...], 0.0)  # (2, Cb)
        a_halo = jnp.dot(h_halo, wtap_ref[...], preferred_element_type=_F32)

        nvalid = jnp.minimum(TL, L - j * TL)
        is_first = j == 0
        is_last = j == pl.num_programs(1) - 1
        lo = jnp.where(is_first, 0.0, a_halo[0:1, :Cb])       # h[start-1] @ M0
        hi = jnp.where(is_last, 0.0, a_halo[1:2, 2 * Cb:])    # h[start+TL] @ M2

        rows = lax.broadcasted_iota(jnp.int32, (TL, 1), 0)
        z = a[:, Cb:2 * Cb]
        z = z + jnp.where(rows == 0, lo, pltpu.roll(a[:, :Cb], 1, axis=0))
        z = z + jnp.where(rows == nvalid - 1, hi,
                          pltpu.roll(a[:, 2 * Cb:], TL - 1, axis=0))
        z_ref[0] = z

        mask = rows < nvalid
        ones = jnp.ones((1, TL), _F32)
        s = jnp.dot(ones, jnp.where(mask, z, 0.0), preferred_element_type=_F32)
        zc = jnp.where(mask, z - s / nvalid.astype(_F32), 0.0)
        sum_ref[0, 0] = s
        m2_ref[0, 0] = jnp.dot(ones, zc * zc, preferred_element_type=_F32)

    z_seq, sum2, m22 = pl.pallas_call(
        branch_mid_kernel,
        out_shape=(jax.ShapeDtypeStruct((B, L, Cb), _F32),
                   jax.ShapeDtypeStruct((B, nL, 1, Cb), _F32),
                   jax.ShapeDtypeStruct((B, nL, 1, Cb), _F32)),
        grid=(B, nL),
        in_specs=[xs_x2_spec,
                  pl.BlockSpec((1, 1, 2, Cb), lambda b, j: (b, j, 0, 0)),
                  _const_spec((Cb, Cb), 2),
                  _const_spec((1, Cb), 2),
                  _const_spec((Cb, 3 * Cb), 2)],
        out_specs=(pl.BlockSpec((1, TL, Cb), lambda b, j: (b, j, 0)),
                   pl.BlockSpec((1, 1, 1, Cb), lambda b, j: (b, j, 0, 0)),
                   pl.BlockSpec((1, 1, 1, Cb), lambda b, j: (b, j, 0, 0))),
        compiler_params=pltpu.CompilerParams(
            dimension_semantics=("parallel", "parallel")),
    )(x, halo, w1e, t1, wtap)

    s2, t2 = _bn_fold(sum2, m22, seq_counts, n_total, eps, g2, b2)
    w2t = w2.astype(_F32).T
    w2e = w2t * s2.reshape(Cb, 1)           # BN2 folded into conv2 input rows
    c2 = jnp.dot(t2, w2t)                   # (1, Cb)

    # ---- Kernel C: u = conv2(BN2(z)) + per-block centered stats of u -------
    def pw2_stats_kernel(z_ref, w2e_ref, c2_ref, u_ref, sum_ref, m2_ref):
        i = pl.program_id(0)
        u = jnp.dot(z_ref[...], w2e_ref[...],
                    preferred_element_type=_F32) + c2_ref[...]
        u_ref[...] = u
        nvalid = jnp.minimum(TR, R - i * TR)
        rows = lax.broadcasted_iota(jnp.int32, (TR, 1), 0)
        mask = rows < nvalid
        ones = jnp.ones((1, TR), _F32)
        s = jnp.dot(ones, jnp.where(mask, u, 0.0), preferred_element_type=_F32)
        uc = jnp.where(mask, u - s / nvalid.astype(_F32), 0.0)
        sum_ref[0] = s
        m2_ref[0] = jnp.dot(ones, uc * uc, preferred_element_type=_F32)

    z_rows = z_seq.reshape(R, Cb)
    u_rows, sum3, m23 = pl.pallas_call(
        pw2_stats_kernel,
        out_shape=(jax.ShapeDtypeStruct((R, Cb), _F32),
                   jax.ShapeDtypeStruct((nb, 1, Cb), _F32),
                   jax.ShapeDtypeStruct((nb, 1, Cb), _F32)),
        grid=(nb,),
        in_specs=[pl.BlockSpec((TR, Cb), lambda i: (i, 0)),
                  _const_spec((Cb, Cb), 1),
                  _const_spec((1, Cb), 1)],
        out_specs=(pl.BlockSpec((TR, Cb), lambda i: (i, 0)),
                   pl.BlockSpec((1, 1, Cb), lambda i: (i, 0, 0)),
                   pl.BlockSpec((1, 1, Cb), lambda i: (i, 0, 0))),
        compiler_params=pltpu.CompilerParams(dimension_semantics=("parallel",)),
    )(z_rows, w2e, c2)

    s3, t3 = _bn_fold(sum3, m23, row_counts, n_total, eps, g3, b3)

    # lane-interleave scatter matrices: x1 -> even channels, branch2 -> odd
    eye = jnp.eye(Cb, dtype=_F32)
    se = jnp.zeros((Cb, C), _F32).at[:, 0::2].set(eye)
    so = jnp.zeros((Cb, C), _F32).at[:, 1::2].set(eye)

    # ---- Kernel D: BN3 + ReLU + channel shuffle (lane-dense output) --------
    def finalize_kernel(u_ref, x_ref, s3_ref, t3_ref, se_ref, so_ref, out_ref):
        xb = x_ref[...]
        x1 = xb if half_ok else xb[:, :Cb]
        v = jnp.maximum(u_ref[...] * s3_ref[...] + t3_ref[...], 0.0)
        out_ref[...] = (
            jnp.dot(x1, se_ref[...], preferred_element_type=_F32)
            + jnp.dot(v, so_ref[...], preferred_element_type=_F32))

    out_rows = pl.pallas_call(
        finalize_kernel,
        out_shape=jax.ShapeDtypeStruct((R, C), _F32),
        grid=(nb,),
        in_specs=[pl.BlockSpec((TR, Cb), lambda i: (i, 0)),
                  xr_x1_spec,
                  _const_spec((1, Cb), 1),
                  _const_spec((1, Cb), 1),
                  _const_spec((Cb, C), 1),
                  _const_spec((Cb, C), 1)],
        out_specs=pl.BlockSpec((TR, C), lambda i: (i, 0)),
        compiler_params=pltpu.CompilerParams(dimension_semantics=("parallel",)),
    )(u_rows, x_rows, s3, t3, se, so)

    return out_rows.reshape(B, L, C)


# ---------------------------------------------------------------------------
# Pure-JAX reference (independent implementation for correctness check)
# ---------------------------------------------------------------------------
def reference(x, w1, wd, w2, *, eps=1e-5):
    B, L, C = x.shape
    Cb = C // 2
    x1, x2 = x[..., :Cb], x[..., Cb:]

    def bn(y):  # training-mode BatchNorm1d, gamma=1, beta=0
        mean = jnp.mean(y, axis=(0, 1), keepdims=True)
        var = jnp.mean((y - mean) ** 2, axis=(0, 1), keepdims=True)
        return (y - mean) / jnp.sqrt(var + eps)

    h = jnp.maximum(bn(jnp.einsum('blc,oc->blo', x2, w1)), 0.0)
    hp = jnp.pad(h, ((0, 0), (1, 1), (0, 0)))
    hg = hp.reshape(B, L + 2, Cb // 2, 2)
    wdg = wd.reshape(Cb // 2, 2, 2, 3)                        # (g, o, j, k)
    win = jnp.stack([hg[:, k:k + L] for k in range(3)], axis=-1)  # (B,L,G,2,3)
    z = jnp.einsum('blgjk,gojk->blgo', win, wdg).reshape(B, L, Cb)
    u = jnp.einsum('blc,oc->blo', bn(z), w2)
    v = jnp.maximum(bn(u), 0.0)
    return jnp.stack([x1, v], axis=-1).reshape(B, L, C)       # channel shuffle


if __name__ == "__main__":
    # Shapes consistent with the module: stride=1 requires input_dim ==
    # output_dim, and context_size=3 is the length-preserving configuration
    # with the module's hard-coded padding=1.
    input_dim = output_dim = 64
    context_size = 3
    Cb = output_dim // 2

    key = jax.random.PRNGKey(0)
    kx, k1, kd, k2, kx2 = jax.random.split(key, 5)

    def conv_init(k, shape, fan_in):
        bound = 1.0 / (fan_in ** 0.5)
        return jax.random.uniform(k, shape, jnp.float32, -bound, bound)

    w1 = conv_init(k1, (Cb, Cb), Cb)                 # branch2[0] Conv1d(Cb, Cb, 1)
    wd = conv_init(kd, (Cb, 2, context_size), 2 * context_size)  # branch2[3] gconv
    w2 = conv_init(k2, (Cb, Cb), Cb)                 # branch2[5] Conv1d(Cb, Cb, 1)

    # Test 1: default tiling (single tile per kernel at this small shape).
    x = jax.random.normal(kx, (2, 16, input_dim), dtype=jnp.float32)
    out = jax.block_until_ready(shuffle_td_layer(x, w1, wd, w2))
    ref = reference(x, w1, wd, w2)
    assert out.shape == x.shape
    assert jnp.allclose(out, ref, atol=1e-4, rtol=1e-4), \
        float(jnp.max(jnp.abs(out - ref)))

    # Test 2: force multi-tile grids with masked tail blocks and seq halos.
    xb = jax.random.normal(kx2, (2, 10, input_dim), dtype=jnp.float32)
    out_b = jax.block_until_ready(
        shuffle_td_layer(xb, w1, wd, w2, row_tile=8, seq_tile=8))
    ref_b = reference(xb, w1, wd, w2)
    assert out_b.shape == xb.shape
    assert jnp.allclose(out_b, ref_b, atol=1e-4, rtol=1e-4), \
        float(jnp.max(jnp.abs(out_b - ref_b)))

    print("KERNEL_OK")
</pallas_src>

<mosaic_0001>
module attributes {stable_mosaic.version = 11 : i64} {
  func.func @_probe(%arg0: i32, %arg1: memref<8x128xf32, #tpu.memory_space<vmem>>, %arg2: memref<8x128xf32, #tpu.memory_space<vmem>>, %arg3: memref<8x128xf32, #tpu.memory_space<vmem>>) attributes {dimension_semantics = [#tpu.dimension_semantics<arbitrary>], iteration_bounds = array<i64: 2>, scalar_prefetch = 0 : i64, scratch_operands = 0 : i64, tpu.core_type = #tpu.core_type<tc>, window_params = [{transform_indices = @transform_0, window_bounds = array<i64: 8, 128>}, {pipeline_mode = #tpu.pipeline_mode<synchronous>, transform_indices = @transform_1, window_bounds = array<i64: 8, 128>}, {transform_indices = @transform_2, window_bounds = array<i64: 8, 128>}]} {
    %c0 = arith.constant 0 : index
    %c0_0 = arith.constant 0 : index
    %0 = vector.load %arg1[%c0, %c0_0] : memref<8x128xf32, #tpu.memory_space<vmem>>, vector<8x128xf32>
    %c0_1 = arith.constant 0 : index
    %c0_2 = arith.constant 0 : index
    %1 = vector.load %arg2[%c0_1, %c0_2] : memref<8x128xf32, #tpu.memory_space<vmem>>, vector<8x128xf32>
    %2 = arith.addf %0, %1 : vector<8x128xf32>
    %c0_3 = arith.constant 0 : index
    %c0_4 = arith.constant 0 : index
    %3 = vector.load %arg3[%c0_3, %c0_4] : memref<8x128xf32, #tpu.memory_space<vmem>>, vector<8x128xf32>
    tpu.vector_store %arg3[%c0_3, %c0_4], %2 {strides = array<i32>} : memref<8x128xf32, #tpu.memory_space<vmem>>, vector<8x128xf32>,
    return
  }
  func.func @transform_0(%arg0: i32) -> (i32, i32) {
    %c0_i32 = arith.constant 0 : i32
    %c0_i32_0 = arith.constant 0 : i32
    return %arg0, %c0_i32 : i32, i32
  }
  func.func @transform_1(%arg0: i32) -> (i32, i32) {
    %c0_i32 = arith.constant 0 : i32
    %c0_i32_0 = arith.constant 0 : i32
    %c0_i32_1 = arith.constant 0 : i32
    return %c0_i32, %c0_i32_0 : i32, i32
  }
  func.func @transform_2(%arg0: i32) -> (i32, i32) {
    %c0_i32 = arith.constant 0 : i32
    %c0_i32_0 = arith.constant 0 : i32
    return %arg0, %c0_i32 : i32, i32
  }
}

module attributes {stable_mosaic.version = 11 : i64} {
  func.func @pw1_stats_kernel(%arg0: i32, %arg1: memref<32x64xf32, #tpu.memory_space<vmem>>, %arg2: memref<32x32xf32, #tpu.memory_space<vmem>>, %arg3: memref<1x1x32xf32, #tpu.memory_space<vmem>>, %arg4: memref<1x1x32xf32, #tpu.memory_space<vmem>>) attributes {dimension_semantics = [#tpu.dimension_semantics<parallel>], iteration_bounds = array<i64: 1>, scalar_prefetch = 0 : i64, scratch_operands = 0 : i64, tpu.core_type = #tpu.core_type<tc>, window_params = [{transform_indices = @transform_0, window_bounds = array<i64: 32, 64>}, {pipeline_mode = #tpu.pipeline_mode<synchronous>, transform_indices = @transform_1, window_bounds = array<i64: 32, 32>}, {transform_indices = @transform_2, window_bounds = array<i64: 1, 1, 32>}, {transform_indices = @transform_3, window_bounds = array<i64: 1, 1, 32>}]} {
    %c0 = arith.constant 0 : index
    %c0_0 = arith.constant 0 : index
    %0 = vector.load %arg1[%c0, %c0_0] : memref<32x64xf32, #tpu.memory_space<vmem>>, vector<32x64xf32>
    %1 = vector.extract_strided_slice %0 {offsets = [0, 32], sizes = [32, 32], strides = [1, 1]} : vector<32x64xf32> to vector<32x32xf32>
    %c0_1 = arith.constant 0 : index
    %c0_2 = arith.constant 0 : index
    %2 = vector.load %arg2[%c0_1, %c0_2] : memref<32x32xf32, #tpu.memory_space<vmem>>, vector<32x32xf32>
    %cst = arith.constant dense<0.000000e+00> : vector<32x32xf32>
    %3 = tpu.matmul %1, %2, %cst {dimension_numbers = #tpu.dot_dimension_numbers<[1], [0], [0], [1], [0, 0, 1, 1], [], []>} : vector<32x32xf32>, vector<32x32xf32>, vector<32x32xf32> -> vector<32x32xf32>
    %c32_i32 = arith.constant 32 : i32
    %4 = arith.muli %arg0, %c32_i32 : i32
    %c32_i32_3 = arith.constant 32 : i32
    %5 = arith.subi %c32_i32_3, %4 : i32
    %c32_i32_4 = arith.constant 32 : i32
    %6 = arith.minsi %c32_i32_4, %5 : i32
    %7 = tpu.iota {dimensions = array<i32: 0>} : vector<32x1xi32>
    %8 = vector.broadcast %6 : i32 to vector<32x1xi32>
    %9 = arith.cmpi slt, %7, %8 : vector<32x1xi32>
    %cst_5 = arith.constant 1.000000e+00 : f32
    %10 = vector.broadcast %cst_5 : f32 to vector<1x32xf32>
    %cst_6 = arith.constant 0.000000e+00 : f32
    %11 = vector.shape_cast %9 : vector<32x1xi1> to vector<32x1xi1>
    %12 = vector.broadcast %11 : vector<32x1xi1> to vector<32x32xi1>
    %13 = vector.broadcast %cst_6 : f32 to vector<32x32xf32>
    %14 = arith.select %12, %3, %13 : vector<32x32xi1>, vector<32x32xf32>
    %cst_7 = arith.constant dense<0.000000e+00> : vector<1x32xf32>
    %15 = tpu.matmul %10, %14, %cst_7 {dimension_numbers = #tpu.dot_dimension_numbers<[1], [0], [0], [1], [0, 0, 1, 1], [], []>} : vector<1x32xf32>, vector<32x32xf32>, vector<1x32xf32> -> vector<1x32xf32>
    %16 = arith.sitofp %6 : i32 to f32
    %17 = vector.broadcast %16 : f32 to vector<1x32xf32>
    %18 = arith.divf %15, %17 : vector<1x32xf32>
    %19 = vector.broadcast %18 : vector<1x32xf32> to vector<32x32xf32>
    %20 = arith.subf %3, %19 : vector<32x32xf32>
    %cst_8 = arith.constant 0.000000e+00 : f32
    %21 = vector.shape_cast %9 : vector<32x1xi1> to vector<32x1xi1>
    %22 = vector.broadcast %21 : vector<32x1xi1> to vector<32x32xi1>
    %23 = vector.broadcast %cst_8 : f32 to vector<32x32xf32>
    %24 = arith.select %22, %20, %23 : vector<32x32xi1>, vector<32x32xf32>
    %c0_9 = arith.constant 0 : index
    %c0_10 = arith.constant 0 : index
    %c0_11 = arith.constant 0 : index
    %25 = vector.load %arg3[%c0_9, %c0_10, %c0_11] : memref<1x1x32xf32, #tpu.memory_space<vmem>>, vector<1x1x32xf32>
    %26 = vector.shape_cast %25 : vector<1x1x32xf32> to vector<1x32xf32>
    %27 = vector.shape_cast %15 : vector<1x32xf32> to vector<1x1x32xf32>
    tpu.vector_store %arg3[%c0_9, %c0_10, %c0_11], %27 {strides = array<i32>} : memref<1x1x32xf32, #tpu.memory_space<vmem>>, vector<1x1x32xf32>,
    %28 = arith.mulf %24, %24 : vector<32x32xf32>
    %cst_12 = arith.constant dense<0.000000e+00> : vector<1x32xf32>
    %29 = tpu.matmul %10, %28, %cst_12 {dimension_numbers = #tpu.dot_dimension_numbers<[1], [0], [0], [1], [0, 0, 1, 1], [], []>} : vector<1x32xf32>, vector<32x32xf32>, vector<1x32xf32> -> vector<1x32xf32>
    %c0_13 = arith.constant 0 : index
    %c0_14 = arith.constant 0 : index
    %c0_15 = arith.constant 0 : index
    %30 = vector.load %arg4[%c0_13, %c0_14, %c0_15] : memref<1x1x32xf32, #tpu.memory_space<vmem>>, vector<1x1x32xf32>
    %31 = vector.shape_cast %30 : vector<1x1x32xf32> to vector<1x32xf32>
    %32 = vector.shape_cast %29 : vector<1x32xf32> to vector<1x1x32xf32>
    tpu.vector_store %arg4[%c0_13, %c0_14, %c0_15], %32 {strides = array<i32>} : memref<1x1x32xf32, #tpu.memory_space<vmem>>, vector<1x1x32xf32>,
    return
  }
  func.func @transform_0(%arg0: i32) -> (i32, i32) {
    %c0_i32 = arith.constant 0 : i32
    %c0_i32_0 = arith.constant 0 : i32
    return %arg0, %c0_i32 : i32, i32
  }
  func.func @transform_1(%arg0: i32) -> (i32, i32) {
    %c0_i32 = arith.constant 0 : i32
    %c0_i32_0 = arith.constant 0 : i32
    %c0_i32_1 = arith.constant 0 : i32
    return %c0_i32, %c0_i32_0 : i32, i32
  }
  func.func @transform_2(%arg0: i32) -> (i32, i32, i32) {
    %c0_i32 = arith.constant 0 : i32
    %c0_i32_0 = arith.constant 0 : i32
    %c0_i32_1 = arith.constant 0 : i32
    return %arg0, %c0_i32, %c0_i32_0 : i32, i32, i32
  }
  func.func @transform_3(%arg0: i32) -> (i32, i32, i32) {
    %c0_i32 = arith.constant 0 : i32
    %c0_i32_0 = arith.constant 0 : i32
    %c0_i32_1 = arith.constant 0 : i32
    return %arg0, %c0_i32, %c0_i32_0 : i32, i32, i32
  }
}

</mosaic_0001>

<llo_original>
// kernel: tpu_custom_call.1
$region0: #{tpu_custom_call.1}
  #allocation0 [shape = 'u32[]', space=smem, size = 0x4, offset = 0x4, fixed_abs, tag = 'smem constant byte address 0x4 - core index']
  #allocation1 [shape = 'u32[144,128]{1,0:T(1,128)}', space=vmem, size = 0x12000, scoped, tag = 'internal scratch']
  %s0 = inlined_call_operand.hbm [shape: f32[16,128], index: 0, kind: input, shape index: {}]
  %s1 = inlined_call_operand.hbm [shape: f32[8,128], index: 1, kind: input, shape index: {}]
  %s2 = inlined_call_operand.hbm [shape: f32[16,128], index: 2, kind: output, shape index: {}]
  %s3 = sld [smem:[#allocation0]]
  $region49: #{tpu_custom_call.1} parent=0
    _
  %s5 = ssub.s32 1, %s3
  %s6 = scalar_select 0, %s5, %s3
  $region1: #{tpu_custom_call.1} parent=0
    #allocation2 [shape = 'u8[8192]{0}', space=vmem, size = 0x2000, scoped, tag = 'input window, operand 0']
    #allocation3 [shape = 's32[2]{0}', space=sflag, size = 0x8, scoped, tag = 'scoped memory for tpu_custom_call.1']
    #allocation4 [shape = 's32[2]{0}', space=sflag, size = 0x8, scoped, tag = 'scoped memory for tpu_custom_call.1']
    #allocation5 [shape = 'u8[4096]{0}', space=vmem, size = 0x1000, scoped, tag = 'input window, operand 1, single buffered']
    #allocation6 [shape = 's32[1]{0}', space=sflag, size = 0x4, scoped, tag = 'scoped memory for tpu_custom_call.1']
    #allocation7 [shape = 'u8[8192]{0}', space=vmem, size = 0x2000, scoped, tag = 'output window, operand 0']
    %7 = vsyncpa [#allocation3], 0
    %s8 = scalar_lea.sflag [#allocation3], 1
    %9 = vsyncpa %s8, 0
    %10 = vsyncpa [#allocation6], 0
    %11 = vsyncpa [#allocation4], 0
    %s12 = scalar_lea.sflag [#allocation4], 1
    %13 = vsyncpa %s12, 0
    loop: start=0, step=1, limit=4
    $region2: #{tpu_custom_call.1} parent=1 // loop_pre_header
      _
    $region3: #{tpu_custom_call.1} parent=1 // loop_header
      %s15 = sphi 0, %s19
      %p16 = scmp.ge.s32.totalorder %s15, 4
      %s25 = sphi 0, %s27
      %s28 = sphi 0, %s25
      %s29 = sphi 0, %s28
      %s45 = sphi 0, %s29
      %s49 = sphi 0, %s49
      %s51 = sphi 0, %s49
      %s52 = sphi 0, %s51
      %s66 = sphi 0, %s52
      %s72 = sphi 0, %s74
      %s75 = sphi 0, %s72
      %s76 = sphi 0, %s75
      %s92 = sphi 0, %s76
    $region4: #{tpu_custom_call.1} parent=1 // loop_header_branch
      %18 = sbr.rel (%p16) target = $region8
    $region5: #{tpu_custom_call.1} parent=1 // loop_body
      %s20 = ssub.s32 %s15, 1
      %s21 = ssub.s32 %s15, 2
      %s22 = sadd.s32 %s15, 1
      %s23 = ssub.s32 %s15, %s22
      %p24 = scmp.eq.s32.totalorder %s23, 0
      %s26 = sadd.s32 %s25, 1
      %s27 = scalar_select %p24, %s25, %s26
      %p30 = pneg %p24
      %p31 = scmp.eq.s32.totalorder %s15, 1
      %p32 = por %p30, %p31
      %p33 = scmp.ne.s32.totalorder %s25, %s28
      %p34 = scmp.eq.s32.totalorder %s15, 0
      %p35 = por %p33, %p34
      %p36 = scmp.ne.s32.totalorder %s25, %s28
      %p37 = scmp.eq.s32.totalorder %s20, 1
      %p38 = por %p36, %p37
      %p39 = scmp.ne.s32.totalorder %s28, %s29
      %p40 = scmp.eq.s32.totalorder %s20, 0
      %p41 = por %p39, %p40
      %p42 = scmp.ne.s32.totalorder %s28, %s29
      %p43 = scmp.eq.s32.totalorder %s21, 1
      %p44 = por %p42, %p43
      %p46 = scmp.ne.s32.totalorder %s29, %s45
      %p47 = scmp.eq.s32.totalorder %s21, 0
      %p48 = por %p46, %p47
      %s50 = sadd.s32 %s49, 1
      %p53 = scmp.eq.s32.totalorder %s15, 1
      %p54 = scmp.ne.s32.totalorder %s49, %s51
      %p55 = scmp.eq.s32.totalorder %s15, 0
      %p56 = por %p54, %p55
      %p57 = scmp.ne.s32.totalorder %s49, %s51
      %p58 = scmp.eq.s32.totalorder %s20, 1
      %p59 = por %p57, %p58
      %p60 = scmp.ne.s32.totalorder %s51, %s52
      %p61 = scmp.eq.s32.totalorder %s20, 0
      %p62 = por %p60, %p61
      %p63 = scmp.ne.s32.totalorder %s51, %s52
      %p64 = scmp.eq.s32.totalorder %s21, 1
      %p65 = por %p63, %p64
      %p67 = scmp.ne.s32.totalorder %s52, %s66
      %p68 = scmp.eq.s32.totalorder %s21, 0
      %p69 = por %p67, %p68
      %s70 = ssub.s32 %s15, %s22
      %p71 = scmp.eq.s32.totalorder %s70, 0
      %s73 = sadd.s32 %s72, 1
      %s74 = scalar_select %p71, %s72, %s73
      %p77 = pneg %p71
      %p78 = scmp.eq.s32.totalorder %s15, 1
      %p79 = por %p77, %p78
      %p80 = scmp.ne.s32.totalorder %s72, %s75
      %p81 = scmp.eq.s32.totalorder %s15, 0
      %p82 = por %p80, %p81
      %p83 = scmp.ne.s32.totalorder %s72, %s75
      %p84 = scmp.eq.s32.totalorder %s20, 1
      %p85 = por %p83, %p84
      %p86 = scmp.ne.s32.totalorder %s75, %s76
      %p87 = scmp.eq.s32.totalorder %s20, 0
      %p88 = por %p86, %p87
      %p89 = scmp.ne.s32.totalorder %s75, %s76
      %p90 = scmp.eq.s32.totalorder %s21, 1
      %p91 = por %p89, %p90
      %p93 = scmp.ne.s32.totalorder %s76, %s92
      %p94 = scmp.eq.s32.totalorder %s21, 0
      %p95 = por %p93, %p94
      %p96 = scmp.le.s32.totalorder 1, %s15
      %p97 = scmp.lt.s32.totalorder %s15, 3
      %p98 = pnand %p96, %p97
      %p99 = pneg %p98
      // Predicated region
      $region9: #{tpu_custom_call.1} parent=5 // pred_check
        _
      $region10: #{tpu_custom_call.1} parent=5 // pred_check_branch
        %101 = sbr.rel (%p98) target = $region12
      $region11: #{tpu_custom_call.1} parent=5 // pred_region
        %s102 = ssub.s32 %s15, 1
        // Predicated region
        $region13: #{tpu_custom_call.1} parent=11 // pred_check
          %p103 = pneg %p62
        $region14: #{tpu_custom_call.1} parent=11 // pred_check_branch
          %105 = sbr.rel (%p103) target = $region16
        $region15: #{tpu_custom_call.1} parent=11 // pred_region
          %s107 = ssub.s32 128, 128
          %108 = vsyncadd [#allocation6], %s107
          %s110 = sshll.u32 [#allocation5], 4
          %s111 = int_to_ptr.vmem [resolvable:$true] %s110
          %113 = dma.hbm_to_vmem [thread:$0]  %s1, 128, %s111, [#allocation6]
        $region16: #{tpu_custom_call.1} parent=11 // pred_fallthru
          _
      $region12: #{tpu_custom_call.1} parent=5 // pred_fallthru
        _
      %p114 = scmp.lt.s32.totalorder %s15, 2
      // Predicated region
      $region17: #{tpu_custom_call.1} parent=5 // pred_check
        %p115 = pneg %p114
      $region18: #{tpu_custom_call.1} parent=5 // pred_check_branch
        %117 = sbr.rel (%p115) target = $region20
      $region19: #{tpu_custom_call.1} parent=5 // pred_region
        // Predicated region
        $region21: #{tpu_custom_call.1} parent=19 // pred_check
          %p118 = pneg %p35
        $region22: #{tpu_custom_call.1} parent=19 // pred_check_branch
          %120 = sbr.rel (%p118) target = $region24
        $region23: #{tpu_custom_call.1} parent=19 // pred_region
          %s121 = sand.u32 %s25, 1
          %s122 = scalar_lea.sflag [#allocation3], %s121
          %s123 = sand.u32 %s25, 1
          %s124 = smul.addr %s123, 8
          %s125 = scalar_lea.vmem [#allocation2], %s124
          %s127 = ssub.s32 128, 128
          %128 = vsyncadd %s122, %s127
          %s129 = smul.addr %s15, 128
          %s130 = scalar_lea.hbm %s0, %s129
          %s132 = sshll.u32 %s125, 4
          %s133 = int_to_ptr.vmem [resolvable:$true] %s132
          %135 = dma.hbm_to_vmem [thread:$0]  %s130, 128, %s133, %s122
        $region24: #{tpu_custom_call.1} parent=19 // pred_fallthru
          _
      $region20: #{tpu_custom_call.1} parent=5 // pred_fallthru
        _
      %p136 = scmp.le.s32.totalorder 1, %s15
      %p137 = scmp.lt.s32.totalorder %s15, 3
      %p138 = pnand %p136, %p137
      %p139 = pneg %p138
      // Predicated region
      $region25: #{tpu_custom_call.1} parent=5 // pred_check
        _
      $region26: #{tpu_custom_call.1} parent=5 // pred_check_branch
        %141 = sbr.rel (%p138) target = $region28
      $region27: #{tpu_custom_call.1} parent=5 // pred_region
        %s142 = ssub.s32 %s15, 1
        %s143 = sand.u32 %s28, 1
        %s144 = scalar_lea.sflag [#allocation3], %s143
        %s145 = sand.u32 %s28, 1
        %s146 = smul.addr %s145, 8
        %s147 = scalar_lea.vmem [#allocation2], %s146
        // Predicated region
        $region29: #{tpu_custom_call.1} parent=27 // pred_check
          %p148 = pneg %p41
        $region30: #{tpu_custom_call.1} parent=27 // pred_check_branch
          %150 = sbr.rel (%p148) target = $region32
        $region31: #{tpu_custom_call.1} parent=27 // pred_region
          %151 = dma.done %s144, 128
        $region32: #{tpu_custom_call.1} parent=27 // pred_fallthru
          _
        // Predicated region
        $region33: #{tpu_custom_call.1} parent=27 // pred_check
          %p152 = pneg %p62
        $region34: #{tpu_custom_call.1} parent=27 // pred_check_branch
          %154 = sbr.rel (%p152) target = $region36
        $region35: #{tpu_custom_call.1} parent=27 // pred_region
          %155 = dma.done [#allocation6], 128
        $region36: #{tpu_custom_call.1} parent=27 // pred_fallthru
          _
        %s156 = sand.u32 %s28, 1
        %s157 = scalar_lea.sflag [#allocation3], %s156
        %s158 = sand.u32 %s28, 1
        %s159 = smul.addr %s158, 8
        %s160 = scalar_lea.vmem [#allocation2], %s159
        %p161 = pneg %p41
        %p162 = pneg %p38
        %p163 = pneg %p62
        %p164 = pneg %p59
        %p165 = pneg %p88
        %p166 = pneg %p85
        %s167 = sand.u32 %s75, 1
        %s168 = scalar_lea.sflag [#allocation4], %s167
        %s169 = sand.u32 %s75, 1
        %s170 = smul.addr %s169, 8
        %s171 = scalar_lea.vmem [#allocation7], %s170
        %v172 = vld [vmem:[%s147] sm:$0xff]
        %v173 = vld [vmem:[#allocation5] sm:$0xff]
        %v174 = vadd.f32 %v172, %v173
        %175 = vst [vmem:[%s171] sm:$0xff] %v174
        %s176 = sand.u32 %s75, 1
        %s177 = scalar_lea.sflag [#allocation4], %s176
        %s178 = sand.u32 %s75, 1
        %s179 = smul.addr %s178, 8
        %s180 = scalar_lea.vmem [#allocation7], %s179
        // Predicated region
        $region37: #{tpu_custom_call.1} parent=27 // pred_check
          %p181 = pneg %p85
        $region38: #{tpu_custom_call.1} parent=27 // pred_check_branch
          %183 = sbr.rel (%p181) target = $region40
        $region39: #{tpu_custom_call.1} parent=27 // pred_region
          %s185 = ssub.s32 128, 128
          %186 = vsyncadd %s177, %s185
          %s187 = smul.addr %s20, 128
          %s188 = scalar_lea.hbm %s2, %s187
          %s190 = sshll.u32 %s180, 4
          %s191 = int_to_ptr.vmem [resolvable:$true] %s190
          %193 = dma.vmem_to_hbm [thread:$0]  %s191, 128, %s188, %s177
        $region40: #{tpu_custom_call.1} parent=27 // pred_fallthru
          _
      $region28: #{tpu_custom_call.1} parent=5 // pred_fallthru
        _
      %p194 = scmp.le.s32.totalorder 2, %s15
      // Predicated region
      $region41: #{tpu_custom_call.1} parent=5 // pred_check
        %p195 = pneg %p194
      $region42: #{tpu_custom_call.1} parent=5 // pred_check_branch
        %197 = sbr.rel (%p195) target = $region44
      $region43: #{tpu_custom_call.1} parent=5 // pred_region
        %s198 = ssub.s32 %s15, 2
        // Predicated region
        $region45: #{tpu_custom_call.1} parent=43 // pred_check
          %p199 = pneg %p91
        $region46: #{tpu_custom_call.1} parent=43 // pred_check_branch
          %201 = sbr.rel (%p199) target = $region48
        $region47: #{tpu_custom_call.1} parent=43 // pred_region
          %s202 = sand.u32 %s76, 1
          %s203 = scalar_lea.sflag [#allocation4], %s202
          %s204 = sand.u32 %s76, 1
          %s205 = smul.addr %s204, 8
          %s206 = scalar_lea.vmem [#allocation7], %s205
          %207 = dma.done %s203, 128
        $region48: #{tpu_custom_call.1} parent=43 // pred_fallthru
          _
      $region44: #{tpu_custom_call.1} parent=5 // pred_fallthru
        _
    $region6: #{tpu_custom_call.1} parent=1 // loop_footer
      %s19 = sadd.s32 1, %s15
    $region7: #{tpu_custom_call.1} parent=1 // loop_footer_branch
      %14 = sbr.rel target = $region3
    $region8: #{tpu_custom_call.1} parent=1 // loop_exit
      _
    %208 = vsyncpa [#allocation3], 1
    %s209 = scalar_lea.sflag [#allocation3], 1
    %210 = vsyncpa %s209, 1
    %211 = vsyncpa [#allocation6], 1
    %212 = vsyncpa [#allocation4], 1
    %s213 = scalar_lea.sflag [#allocation4], 1
    %214 = vsyncpa %s213, 1

// kernel: tpu_custom_call.1
$region0: #{tpu_custom_call.1}
  #allocation0 [shape = 'u32[]', space=smem, size = 0x4, offset = 0x4, fixed_abs, tag = 'smem constant byte address 0x4 - core index']
  #allocation1 [shape = 'u32[144,128]{1,0:T(1,128)}', space=vmem, size = 0x12000, scoped, tag = 'internal scratch']
  %s0 = inlined_call_operand.hbm [shape: f32[32,64], index: 0, kind: input, shape index: {}]
  %s1 = inlined_call_operand.hbm [shape: f32[32,32], index: 1, kind: input, shape index: {}]
  %s2 = inlined_call_operand.hbm [shape: f32[1,1,32], index: 2, kind: output, shape index: {0}]
  %s3 = inlined_call_operand.hbm [shape: f32[1,1,32], index: 3, kind: output, shape index: {1}]
  %4 = xla_tuple %s2, %s3
  %s5 = sld [smem:[#allocation0]]
  $region34: #{tpu_custom_call.1} parent=0
    _
  %s7 = ssub.s32 1, %s5
  %s8 = scalar_select 0, %s7, %s5
  $region1: #{tpu_custom_call.1} parent=0
    #allocation2 [shape = 'u8[16384]{0}', space=vmem, size = 0x4000, scoped, tag = 'input window, operand 0, single buffered']
    #allocation3 [shape = 's32[1]{0}', space=sflag, size = 0x4, scoped, tag = 'scoped memory for tpu_custom_call.1']
    #allocation4 [shape = 's32[1]{0}', space=sflag, size = 0x4, scoped, tag = 'scoped memory for tpu_custom_call.1']
    #allocation5 [shape = 'u8[16384]{0}', space=vmem, size = 0x4000, scoped, tag = 'input window, operand 1, single buffered']
    #allocation6 [shape = 's32[1]{0}', space=sflag, size = 0x4, scoped, tag = 'scoped memory for tpu_custom_call.1']
    #allocation7 [shape = 'u8[512]{0}', space=vmem, size = 0x400, scoped, tag = 'output window, operand 0, single buffered']
    #allocation8 [shape = 'u8[512]{0}', space=vmem, size = 0x400, scoped, tag = 'output window, operand 1, single buffered']
    #allocation9 [shape = 's32[1]{0}', space=sflag, size = 0x4, scoped, tag = 'scoped memory for tpu_custom_call.1']
    %9 = vsyncpa [#allocation3], 0
    %10 = vsyncpa [#allocation6], 0
    %11 = vsyncpa [#allocation4], 0
    %12 = vsyncpa [#allocation9], 0
    // Predicated region
    $region2: #{tpu_custom_call.1} parent=1 // pred_check
      _
    $region3: #{tpu_custom_call.1} parent=1 // pred_check_branch
      %14 = sbr.rel (0) target = $region5
    $region4: #{tpu_custom_call.1} parent=1 // pred_region
      %s16 = ssub.s32 512, 512
      %17 = vsyncadd [#allocation3], %s16
      %s18 = sshll.u32 [#allocation2], 4
      %s19 = int_to_ptr.vmem [resolvable:$true] %s18
      %24 = dma.hbm_to_vmem [thread:$0]  %s0, 512, %s19, [#allocation3], 128, 128, 8
    $region5: #{tpu_custom_call.1} parent=1 // pred_fallthru
      _
    // Predicated region
    $region6: #{tpu_custom_call.1} parent=1 // pred_check
      _
    $region7: #{tpu_custom_call.1} parent=1 // pred_check_branch
      %26 = sbr.rel (0) target = $region9
    $region8: #{tpu_custom_call.1} parent=1 // pred_region
      %s28 = ssub.s32 512, 512
      %29 = vsyncadd [#allocation6], %s28
      %s30 = sshll.u32 [#allocation5], 4
      %s31 = int_to_ptr.vmem [resolvable:$true] %s30
      %36 = dma.hbm_to_vmem [thread:$0]  %s1, 512, %s31, [#allocation6], 128, 128, 8
    $region9: #{tpu_custom_call.1} parent=1 // pred_fallthru
      _
    // Predicated region
    $region10: #{tpu_custom_call.1} parent=1 // pred_check
      _
    $region11: #{tpu_custom_call.1} parent=1 // pred_check_branch
      %38 = sbr.rel (0) target = $region13
    $region12: #{tpu_custom_call.1} parent=1 // pred_region
      %39 = dma.done [#allocation3], 512
    $region13: #{tpu_custom_call.1} parent=1 // pred_fallthru
      _
    // Predicated region
    $region14: #{tpu_custom_call.1} parent=1 // pred_check
      _
    $region15: #{tpu_custom_call.1} parent=1 // pred_check_branch
      %41 = sbr.rel (0) target = $region17
    $region16: #{tpu_custom_call.1} parent=1 // pred_region
      %42 = dma.done [#allocation6], 512
    $region17: #{tpu_custom_call.1} parent=1 // pred_fallthru
      _
    %v43 = vld [vmem:[#allocation2] sm:$0xff]
    %v44 = vld [vmem:[#allocation2 + $0x8] sm:$0xff]
    %v45 = vld [vmem:[#allocation2 + $0x10] sm:$0xff]
    %v46 = vld [vmem:[#allocation2 + $0x18] sm:$0xff]
    %v47 = vld [vmem:[#allocation5] sm:$0xff]
    %v48 = vld [vmem:[#allocation5 + $0x8] sm:$0xff]
    %v49 = vld [vmem:[#allocation5 + $0x10] sm:$0xff]
    %v50 = vld [vmem:[#allocation5 + $0x18] sm:$0xff]
    %55 = vrot.lane.b32.xlu0 %v43, 96
    %v56 = vpop.permute.xlu0 %55
    %57 = vrot.lane.b32.xlu0 %v44, 96
    %v58 = vpop.permute.xlu0 %57
    %59 = vrot.lane.b32.xlu0 %v45, 96
    %v60 = vpop.permute.xlu0 %59
    %61 = vrot.lane.b32.xlu0 %v46, 96
    %v62 = vpop.permute.xlu0 %61
    %vm63 = vcmask 261120
    %v64 = vsel %vm63, %v56, 0
    %v66 = vsel %vm63, %v58, 0
    %v68 = vsel %vm63, %v60, 0
    %v70 = vsel %vm63, %v62, 0
    %72 = vmatprep.subr.mxu0 0.0
    %73 = vmatpush1.msra.mxu0 %v47
    %74 = vmatprep.subr.mxu0 0.0
    %75 = vmatpush1.msra.mxu0 %v48
    %76 = vmatprep.subr.mxu0 0.0
    %77 = vmatpush1.msra.mxu0 %v49
    %78 = vmatprep.subr.mxu0 0.0
    %79 = vmatpush1.msra.mxu0 %v50
    %80 = vmatprep.subr.mxu0 0.0
    %81 = vmatpush1.msra.mxu0 0.0
    %82 = vmatprep.subr.mxu0 0.0
    %83 = vmatpush1.msra.mxu0 0.0
    %84 = vmatprep.subr.mxu0 0.0
    %85 = vmatpush1.msra.mxu0 0.0
    %86 = vmatprep.subr.mxu0 0.0
    %87 = vmatpush1.msra.mxu0 0.0
    %88 = vmatprep.subr.mxu0 0.0
    %89 = vmatpush1.msra.mxu0 0.0
    %90 = vmatprep.subr.mxu0 0.0
    %91 = vmatpush1.msra.mxu0 0.0
    %92 = vmatprep.subr.mxu0 0.0
    %93 = vmatpush1.msra.mxu0 0.0
    %94 = vmatprep.subr.mxu0 0.0
    %95 = vmatpush1.msra.mxu0 0.0
    %96 = vmatprep.subr.mxu0 0.0
    %97 = vmatpush1.msra.mxu0 0.0
    %98 = vmatprep.subr.mxu0 0.0
    %99 = vmatpush1.msra.mxu0 0.0
    %100 = vmatprep.subr.mxu0 0.0
    %101 = vmatpush1.msra.mxu0 0.0
    %102 = vmatprep.subr.mxu0 0.0
    %103 = vmatpush1.msra.mxu0 0.0
    %104 = vmatprep.subr.mxu0 0.0
    %105 = vmatpush1.msra.mxu0 0.0
    %106 = vmatprep.subr.mxu0 0.0
    %107 = vmatpush1.msra.mxu0 0.0
    %108 = vmatprep.subr.mxu0 0.0
    %109 = vmatpush1.msra.mxu0 0.0
    %110 = vmatprep.subr.mxu0 0.0
    %111 = vmatpush1.msra.mxu0 0.0
    %112 = vmatprep.subr.mxu0 0.0
    %113 = vmatpush1.msra.mxu0 0.0
    %114 = vmatprep.subr.mxu0 0.0
    %115 = vmatpush1.msra.mxu0 0.0
    %116 = vmatprep.subr.mxu0 0.0
    %117 = vmatpush1.msra.mxu0 0.0
    %118 = vmatprep.subr.mxu0 0.0
    %119 = vmatpush1.msra.mxu0 0.0
    %120 = vmatprep.subr.mxu0 0.0
    %121 = vmatpush1.msra.mxu0 0.0
    %122 = vmatprep.subr.mxu0 0.0
    %123 = vmatpush1.msra.mxu0 0.0
    %124 = vmatprep.subr.mxu0 0.0
    %125 = vmatpush1.msra.mxu0 0.0
    %126 = vmatprep.subr.mxu0 0.0
    %127 = vmatpush1.msra.mxu0 0.0
    %128 = vmatprep.subr.mxu0 0.0
    %129 = vmatpush1.msra.mxu0 0.0
    %130 = vmatprep.subr.mxu0 0.0
    %131 = vmatpush1.msra.mxu0 0.0
    %132 = vmatprep.subr.mxu0 0.0
    %133 = vmatpush1.msra.mxu0 0.0
    %134 = vmatprep.subr.mxu0 0.0
    %135 = vmatpush1.msra.mxu0 0.0
    %136 = vmatprep.mubr.f32.mxu0 0.0
    %137 = vmatmul.mubr.f32.gmra.mrb[0].mxu0 %v64
    %v138 = vpop.f32.mrb[0].mxu0
    %v139 = vadd.f32 0.0, %v138
    %v140 = vpop.f32.mrb[0].mxu0
    %141 = vmatprep.mubr.f32.mxu0 0.0
    %142 = vmatmul.mubr.f32.gmra.mrb[0].mxu0 %v66
    %v143 = vpop.f32.mrb[0].mxu0
    %v144 = vadd.f32 0.0, %v143
    %v145 = vpop.f32.mrb[0].mxu0
    %146 = vmatprep.mubr.f32.mxu0 0.0
    %147 = vmatmul.mubr.f32.gmra.mrb[0].mxu0 %v68
    %v148 = vpop.f32.mrb[0].mxu0
    %v149 = vadd.f32 0.0, %v148
    %v150 = vpop.f32.mrb[0].mxu0
    %151 = vmatprep.mubr.f32.mxu0 0.0
    %152 = vmatmul.mubr.f32.gmra.mrb[0].mxu0 %v70
    %v153 = vpop.f32.mrb[0].mxu0
    %v154 = vadd.f32 0.0, %v153
    %v155 = vpop.f32.mrb[0].mxu0
    %156 = vdwg.mxu0
    %s157 = smul.u32 0, 32
    %s158 = ssub.s32 32, %s157
    %p159 = scmp.lt.s32.totalorder %s158, 32
    %s160 = scalar_select %p159, %s158, 32
    %v161 = vlaneseq
    %v162 = vshrl.u32 %v161, 7
    %v163 = vadd.s32 %v162, 8
    %v164 = vadd.s32 %v162, 16
    %v165 = vadd.s32 %v162, 24
    %v166 = vstv %s160
    %vm167 = vcmp.lt.s32.totalorder %v162, %v166
    %vm168 = vcmp.lt.s32.totalorder %v163, %v166
    %vm169 = vcmp.lt.s32.totalorder %v164, %v166
    %vm170 = vcmp.lt.s32.totalorder %v165, %v166
    %v171 = vsel %vm167, 1, 0
    %v172 = vsel %vm168, 1, 0
    %v173 = vsel %vm169, 1, 0
    %v174 = vsel %vm170, 1, 0
    %vm175 = vcmp.eq.s32.totalorder %v171, 1
    %vm176 = vcmp.eq.s32.totalorder %v172, 1
    %vm177 = vcmp.eq.s32.totalorder %v173, 1
    %vm178 = vcmp.eq.s32.totalorder %v174, 1
    %v179 = vsel %vm175, %v139, 0.0
    %v180 = vsel %vm176, %v144, 0.0
    %v181 = vsel %vm177, %v149, 0.0
    %v182 = vsel %vm178, %v154, 0.0
    %v184 = vsel %vm63, 1.0, 0
    %186 = vmatprep.subr.mxu0 0.0
    %187 = vmatpush1.msra.mxu0 %v179
    %188 = vmatprep.subr.mxu0 0.0
    %189 = vmatpush1.msra.mxu0 %v180
    %190 = vmatprep.subr.mxu0 0.0
    %191 = vmatpush1.msra.mxu0 %v181
    %192 = vmatprep.subr.mxu0 0.0
    %193 = vmatpush1.msra.mxu0 %v182
    %194 = vmatprep.subr.mxu0 0.0
    %195 = vmatpush1.msra.mxu0 0.0
    %196 = vmatprep.subr.mxu0 0.0
    %197 = vmatpush1.msra.mxu0 0.0
    %198 = vmatprep.subr.mxu0 0.0
    %199 = vmatpush1.msra.mxu0 0.0
    %200 = vmatprep.subr.mxu0 0.0
    %201 = vmatpush1.msra.mxu0 0.0
    %202 = vmatprep.subr.mxu0 0.0
    %203 = vmatpush1.msra.mxu0 0.0
    %204 = vmatprep.subr.mxu0 0.0
    %205 = vmatpush1.msra.mxu0 0.0
    %206 = vmatprep.subr.mxu0 0.0
    %207 = vmatpush1.msra.mxu0 0.0
    %208 = vmatprep.subr.mxu0 0.0
    %209 = vmatpush1.msra.mxu0 0.0
    %210 = vmatprep.subr.mxu0 0.0
    %211 = vmatpush1.msra.mxu0 0.0
    %212 = vmatprep.subr.mxu0 0.0
    %213 = vmatpush1.msra.mxu0 0.0
    %214 = vmatprep.subr.mxu0 0.0
    %215 = vmatpush1.msra.mxu0 0.0
    %216 = vmatprep.subr.mxu0 0.0
    %217 = vmatpush1.msra.mxu0 0.0
    %218 = vmatprep.subr.mxu0 0.0
    %219 = vmatpush1.msra.mxu0 0.0
    %220 = vmatprep.subr.mxu0 0.0
    %221 = vmatpush1.msra.mxu0 0.0
    %222 = vmatprep.subr.mxu0 0.0
    %223 = vmatpush1.msra.mxu0 0.0
    %224 = vmatprep.subr.mxu0 0.0
    %225 = vmatpush1.msra.mxu0 0.0
    %226 = vmatprep.subr.mxu0 0.0
    %227 = vmatpush1.msra.mxu0 0.0
    %228 = vmatprep.subr.mxu0 0.0
    %229 = vmatpush1.msra.mxu0 0.0
    %230 = vmatprep.subr.mxu0 0.0
    %231 = vmatpush1.msra.mxu0 0.0
    %232 = vmatprep.subr.mxu0 0.0
    %233 = vmatpush1.msra.mxu0 0.0
    %234 = vmatprep.subr.mxu0 0.0
    %235 = vmatpush1.msra.mxu0 0.0
    %236 = vmatprep.subr.mxu0 0.0
    %237 = vmatpush1.msra.mxu0 0.0
    %238 = vmatprep.subr.mxu0 0.0
    %239 = vmatpush1.msra.mxu0 0.0
    %240 = vmatprep.subr.mxu0 0.0
    %241 = vmatpush1.msra.mxu0 0.0
    %242 = vmatprep.subr.mxu0 0.0
    %243 = vmatpush1.msra.mxu0 0.0
    %244 = vmatprep.subr.mxu0 0.0
    %245 = vmatpush1.msra.mxu0 0.0
    %246 = vmatprep.subr.mxu0 0.0
    %247 = vmatpush1.msra.mxu0 0.0
    %248 = vmatprep.subr.mxu0 0.0
    %249 = vmatpush1.msra.mxu0 0.0
    %250 = vmatprep.mubr.f32.mxu0 0.0
    %251 = vmatmul.mubr.f32.gmra.mrb[0].mxu0 %v184
    %v252 = vpop.f32.mrb[0].mxu0
    %v253 = vadd.f32 0.0, %v252
    %v254 = vpop.f32.mrb[0].mxu0
    %255 = vdwg.mxu0
    %s256 = scvt.s32.f32 %s160
    %v257 = vstv %s256
    %v258 = vrcp.pop %v257
    %v259 = vmul.f32 %v253, %v258
    %v260 = vlaneseq
    %v261 = vshrl.u32 %v260, 7
    %v262 = vsub.s32 0, %v261
    %v263 = vrot.slane %v259, %v262
    %v264 = vsub.f32 %v139, %v263
    %v265 = vsub.f32 %v144, %v263
    %v266 = vsub.f32 %v149, %v263
    %v267 = vsub.f32 %v154, %v263
    %v268 = vsel %vm175, %v264, 0.0
    %v269 = vsel %vm176, %v265, 0.0
    %v270 = vsel %vm177, %v266, 0.0
    %v271 = vsel %vm178, %v267, 0.0
    %vm272 = vcmask 253952
    %273 = vst.msk [vmem:[#allocation7] sm:$0x1] %vm272, %v253
    %v274 = vmul.f32 %v268, %v268
    %v275 = vmul.f32 %v269, %v269
    %v276 = vmul.f32 %v270, %v270
    %v277 = vmul.f32 %v271, %v271
    %278 = vmatprep.subr.mxu0 0.0
    %279 = vmatpush1.msra.mxu0 %v274
    %280 = vmatprep.subr.mxu0 0.0
    %281 = vmatpush1.msra.mxu0 %v275
    %282 = vmatprep.subr.mxu0 0.0
    %283 = vmatpush1.msra.mxu0 %v276
    %284 = vmatprep.subr.mxu0 0.0
    %285 = vmatpush1.msra.mxu0 %v277
    %286 = vmatprep.subr.mxu0 0.0
    %287 = vmatpush1.msra.mxu0 0.0
    %288 = vmatprep.subr.mxu0 0.0
    %289 = vmatpush1.msra.mxu0 0.0
    %290 = vmatprep.subr.mxu0 0.0
    %291 = vmatpush1.msra.mxu0 0.0
    %292 = vmatprep.subr.mxu0 0.0
    %293 = vmatpush1.msra.mxu0 0.0
    %294 = vmatprep.subr.mxu0 0.0
    %295 = vmatpush1.msra.mxu0 0.0
    %296 = vmatprep.subr.mxu0 0.0
    %297 = vmatpush1.msra.mxu0 0.0
    %298 = vmatprep.subr.mxu0 0.0
    %299 = vmatpush1.msra.mxu0 0.0
    %300 = vmatprep.subr.mxu0 0.0
    %301 = vmatpush1.msra.mxu0 0.0
    %302 = vmatprep.subr.mxu0 0.0
    %303 = vmatpush1.msra.mxu0 0.0
    %304 = vmatprep.subr.mxu0 0.0
    %305 = vmatpush1.msra.mxu0 0.0
    %306 = vmatprep.subr.mxu0 0.0
    %307 = vmatpush1.msra.mxu0 0.0
    %308 = vmatprep.subr.mxu0 0.0
    %309 = vmatpush1.msra.mxu0 0.0
    %310 = vmatprep.subr.mxu0 0.0
    %311 = vmatpush1.msra.mxu0 0.0
    %312 = vmatprep.subr.mxu0 0.0
    %313 = vmatpush1.msra.mxu0 0.0
    %314 = vmatprep.subr.mxu0 0.0
    %315 = vmatpush1.msra.mxu0 0.0
    %316 = vmatprep.subr.mxu0 0.0
    %317 = vmatpush1.msra.mxu0 0.0
    %318 = vmatprep.subr.mxu0 0.0
    %319 = vmatpush1.msra.mxu0 0.0
    %320 = vmatprep.subr.mxu0 0.0
    %321 = vmatpush1.msra.mxu0 0.0
    %322 = vmatprep.subr.mxu0 0.0
    %323 = vmatpush1.msra.mxu0 0.0
    %324 = vmatprep.subr.mxu0 0.0
    %325 = vmatpush1.msra.mxu0 0.0
    %326 = vmatprep.subr.mxu0 0.0
    %327 = vmatpush1.msra.mxu0 0.0
    %328 = vmatprep.subr.mxu0 0.0
    %329 = vmatpush1.msra.mxu0 0.0
    %330 = vmatprep.subr.mxu0 0.0
    %331 = vmatpush1.msra.mxu0 0.0
    %332 = vmatprep.subr.mxu0 0.0
    %333 = vmatpush1.msra.mxu0 0.0
    %334 = vmatprep.subr.mxu0 0.0
    %335 = vmatpush1.msra.mxu0 0.0
    %336 = vmatprep.subr.mxu0 0.0
    %337 = vmatpush1.msra.mxu0 0.0
    %338 = vmatprep.subr.mxu0 0.0
    %339 = vmatpush1.msra.mxu0 0.0
    %340 = vmatprep.subr.mxu0 0.0
    %341 = vmatpush1.msra.mxu0 0.0
    %342 = vmatprep.mubr.f32.mxu0 0.0
    %343 = vmatmul.mubr.f32.gmra.mrb[0].mxu0 %v184
    %v344 = vpop.f32.mrb[0].mxu0
    %v345 = vadd.f32 0.0, %v344
    %v346 = vpop.f32.mrb[0].mxu0
    %347 = vdwg.mxu0
    %348 = vst.msk [vmem:[#allocation8] sm:$0x1] %vm272, %v345
    // Predicated region
    $region18: #{tpu_custom_call.1} parent=1 // pred_check
      _
    $region19: #{tpu_custom_call.1} parent=1 // pred_check_branch
      %350 = sbr.rel (0) target = $region21
    $region20: #{tpu_custom_call.1} parent=1 // pred_region
      %s352 = ssub.s32 16, 16
      %353 = vsyncadd [#allocation4], %s352
      %s355 = sshll.u32 [#allocation7], 4
      %s356 = int_to_ptr.vmem [resolvable:$true] %s355
      %358 = dma.vmem_to_hbm [thread:$0]  %s356, 16, %s2, [#allocation4]
    $region21: #{tpu_custom_call.1} parent=1 // pred_fallthru
      _
    // Predicated region
    $region22: #{tpu_custom_call.1} parent=1 // pred_check
      _
    $region23: #{tpu_custom_call.1} parent=1 // pred_check_branch
      %360 = sbr.rel (0) target = $region25
    $region24: #{tpu_custom_call.1} parent=1 // pred_region
      %s362 = ssub.s32 16, 16
      %363 = vsyncadd [#allocation9], %s362
      %s365 = sshll.u32 [#allocation8], 4
      %s366 = int_to_ptr.vmem [resolvable:$true] %s365
      %368 = dma.vmem_to_hbm [thread:$0]  %s366, 16, %s3, [#allocation9]
    $region25: #{tpu_custom_call.1} parent=1 // pred_fallthru
      _
    // Predicated region
    $region26: #{tpu_custom_call.1} parent=1 // pred_check
      _
    $region27: #{tpu_custom_call.1} parent=1 // pred_check_branch
      %370 = sbr.rel (0) target = $region29
    $region28: #{tpu_custom_call.1} parent=1 // pred_region
      %371 = dma.done [#allocation4], 16
    $region29: #{tpu_custom_call.1} parent=1 // pred_fallthru
      _
    // Predicated region
    $region30: #{tpu_custom_call.1} parent=1 // pred_check
      _
    $region31: #{tpu_custom_call.1} parent=1 // pred_check_branch
      %373 = sbr.rel (0) target = $region33
    $region32: #{tpu_custom_call.1} parent=1 // pred_region
      %374 = dma.done [#allocation9], 16
    $region33: #{tpu_custom_call.1} parent=1 // pred_fallthru
      _
    %375 = vsyncpa [#allocation3], 1
    %376 = vsyncpa [#allocation6], 1
    %377 = vsyncpa [#allocation4], 1
    %378 = vsyncpa [#allocation9], 1

</llo_original>
